<compile_context>
chip_gen: v7x
topology: tpu7x:2x2x1
jax: 0.10.0
libtpu: 0.0.40
codegen_flags: <defaults>
</compile_context>

<pallas_src>
import jax
import jax.numpy as jnp
from jax import lax
from jax.experimental import pallas as pl
from jax.experimental.pallas import tpu as pltpu


_VREG_F32_BUDGET = 32 * 1024  # ~32 vregs of live f32 per streaming chunk


def _pick_chunk(lead, rows):
    """Lane-chunk size for the streaming loops (multiple of 128, avoids vreg spills)."""
    chunk = (_VREG_F32_BUDGET // max(1, lead * rows)) // 128 * 128
    return max(128, chunk)


def _chunked_sum_max(x_ref):
    """Single streaming pass over the last axis of x_ref (L, R, HW).

    Each chunk is loaded once and feeds BOTH the running sum and the running max,
    halving reduce-phase VMEM read traffic vs. separate jnp.sum / jnp.max passes.
    Returns (sum, max), each (L, R, 1) float32.
    """
    lead, rows, hw = x_ref.shape
    chunk = _pick_chunk(lead, rows)
    n_full = hw // chunk
    rem = hw - n_full * chunk

    def step(xv, s, m):
        xv = xv.astype(jnp.float32)
        return (s + jnp.sum(xv, axis=-1, keepdims=True),
                jnp.maximum(m, jnp.max(xv, axis=-1, keepdims=True)))

    if n_full == 0:  # whole slab fits in a single chunk: one shared load
        xv = x_ref[...].astype(jnp.float32)
        return (jnp.sum(xv, axis=-1, keepdims=True),
                jnp.max(xv, axis=-1, keepdims=True))

    def body(i, carry):
        start = pl.multiple_of(i * chunk, chunk)
        return step(x_ref[:, :, pl.ds(start, chunk)], *carry)

    s0 = jnp.zeros((lead, rows, 1), jnp.float32)
    m0 = jnp.full((lead, rows, 1), -jnp.inf, jnp.float32)
    s, m = lax.fori_loop(0, n_full, body, (s0, m0), unroll=(n_full <= 8))
    if rem:
        s, m = step(x_ref[:, :, pl.ds(n_full * chunk, rem)], s, m)
    return s, m


def _chunked_gate(x_ref, o_ref, att):
    """Streaming o = x * att over the last axis; att is (L, R, 1) float32."""
    lead, rows, hw = x_ref.shape
    chunk = _pick_chunk(lead, rows)
    n_full = hw // chunk
    rem = hw - n_full * chunk
    out_dtype = o_ref.dtype

    def gated(xv):
        return (xv.astype(jnp.float32) * att).astype(out_dtype)

    if n_full == 0:
        o_ref[...] = gated(x_ref[...])
        return

    def body(i, carry):
        start = pl.multiple_of(i * chunk, chunk)
        o_ref[:, :, pl.ds(start, chunk)] = gated(x_ref[:, :, pl.ds(start, chunk)])
        return carry

    lax.fori_loop(0, n_full, body, 0, unroll=(n_full <= 8))
    if rem:
        tail = pl.ds(n_full * chunk, rem)
        o_ref[:, :, tail] = gated(x_ref[:, :, tail])


def _make_main_kernel(bb):
    """Single-pass kernel: block = (bb, C, HW) slab resident in VMEM."""

    def kernel(x_ref, w1_ref, w2_ref, o_ref):
        hw = x_ref.shape[2]
        inv_hw = 1.0 / float(hw)

        # 1) Fused spatial mean+max: ONE streaming read of the (bb, C, HW) slab.
        s, m = _chunked_sum_max(x_ref)                      # each (bb, C, 1) f32
        avg = s * inv_hw

        # 2) Squeeze-excite MLP: one MXU matmul pair for all 2*bb pooled vectors,
        #    columns ordered [avg_0 .. avg_{bb-1} | max_0 .. max_{bb-1}].
        cols = [avg[i] for i in range(bb)] + [m[i] for i in range(bb)]
        pooled = jnp.concatenate(cols, axis=-1)             # (C, 2*bb)
        hdn = jnp.maximum(
            jnp.dot(w1_ref[...], pooled, preferred_element_type=jnp.float32), 0.0)
        z = jnp.dot(w2_ref[...], hdn, preferred_element_type=jnp.float32)  # (C, 2*bb)
        gate = jax.nn.sigmoid(z[:, :bb] + z[:, bb:])        # (C, bb) = sig(fc(avg)+fc(max))
        att = jnp.stack([gate[:, i:i + 1] for i in range(bb)], axis=0)     # (bb, C, 1)

        # 3) Gate: second (and last) streaming pass over the slab.
        _chunked_gate(x_ref, o_ref, att)

    return kernel


def _vmem_ceiling():
    """Per-generation VMEM budget: ~48 MiB on v7x (64 MiB physical), ~96 MiB on
    v5e/v6e (128 MiB physical), leaving headroom for Mosaic scratch/semaphores."""
    try:
        cap = int(pltpu.get_tpu_info().vmem_capacity_bytes)
    except Exception:
        cap = 128 << 20
    return max(24 << 20, min(cap * 3 // 4, cap - (16 << 20)))


def _choose_bb(b, c, hw):
    """Batch elements per block: ~2 MiB pipeline buffers, but keep >=2 grid steps
    so v7x's two TensorCores both get work; bb must divide B."""
    per_batch = c * hw * 4
    target = max(1, (2 << 20) // per_batch)
    cap = max(1, b // 2)
    limit = max(1, min(target, cap, b))
    bb = 1
    for d in range(1, limit + 1):
        if b % d == 0:
            bb = d
    return bb


def _channel_attention_two_pass(x, w1, w2, vmem_ceiling):
    """Fallback for feature maps whose (C, HW) slab exceeds the VMEM budget:
    pass 1 reduces per channel tile, the tiny MLP runs as plain XLA, pass 2
    re-streams x and applies the gate.  Channel-tiled, HW kept whole."""
    b, c, hw = x.shape
    inv_hw = 1.0 / float(hw)

    tc = c
    if c % 8 == 0:
        budget = max(8 << 20, vmem_ceiling // 2)
        tc = 8
        for d in range(8, c + 1, 8):
            if c % d == 0 and 6 * (d * hw * 4) + (2 << 20) <= budget:
                tc = d
    # TODO(synk): if even an (8, HW) channel tile exceeds VMEM (HW >~ 500k), also tile HW.

    block_bytes = tc * hw * 4
    vmem_limit = int(min(max(32 << 20, 6 * block_bytes + (4 << 20)), vmem_ceiling))
    grid = (b, c // tc)
    params = pltpu.CompilerParams(dimension_semantics=("parallel", "parallel"),
                                  vmem_limit_bytes=vmem_limit)

    def reduce_kernel(x_ref, avg_ref, max_ref):
        s, m = _chunked_sum_max(x_ref)
        avg_ref[...] = (s * inv_hw).astype(avg_ref.dtype)
        max_ref[...] = m.astype(max_ref.dtype)

    pooled_sds = jax.ShapeDtypeStruct((b, c, 1), jnp.float32)
    avg, mx = pl.pallas_call(
        reduce_kernel,
        out_shape=(pooled_sds, pooled_sds),
        grid_spec=pltpu.PrefetchScalarGridSpec(
            num_scalar_prefetch=0,
            grid=grid,
            in_specs=[pl.BlockSpec((1, tc, hw), lambda i, j: (i, j, 0))],
            out_specs=[pl.BlockSpec((1, tc, 1), lambda i, j: (i, j, 0)),
                       pl.BlockSpec((1, tc, 1), lambda i, j: (i, j, 0))],
        ),
        compiler_params=params,
    )(x)

    # Squeeze-excite MLP on the (B, C) pooled vectors: a few hundred FLOPs -> plain XLA.
    def fc(y):
        return jnp.maximum(y @ w1.T, 0.0) @ w2.T

    att = jax.nn.sigmoid(fc(avg[:, :, 0]) + fc(mx[:, :, 0]))[:, :, None]  # (B, C, 1)

    def gate_kernel(x_ref, att_ref, o_ref):
        _chunked_gate(x_ref, o_ref, att_ref[...].astype(jnp.float32))

    out = pl.pallas_call(
        gate_kernel,
        out_shape=jax.ShapeDtypeStruct((b, c, hw), x.dtype),
        grid_spec=pltpu.PrefetchScalarGridSpec(
            num_scalar_prefetch=0,
            grid=grid,
            in_specs=[pl.BlockSpec((1, tc, hw), lambda i, j: (i, j, 0)),
                      pl.BlockSpec((1, tc, 1), lambda i, j: (i, j, 0))],
            out_specs=pl.BlockSpec((1, tc, hw), lambda i, j: (i, j, 0)),
        ),
        compiler_params=params,
    )(x, att.astype(jnp.float32))
    return out


def channel_attention(x_nchw, w1, w2, *, force_two_pass=False):
    """ChannelAttention forward.  x: (B, C, H, W); w1: (C//r, C); w2: (C, C//r)."""
    b, c, h, w = x_nchw.shape
    hw = h * w
    x = x_nchw.reshape(b, c, hw)  # metadata-only reshape; no HBM copy

    vmem_ceiling = _vmem_ceiling()
    weight_bytes = 4 * (int(w1.size) + int(w2.size))
    single_pass_bytes = 4 * (c * hw * 4) + 2 * weight_bytes + (4 << 20)

    if force_two_pass or single_pass_bytes > vmem_ceiling:
        out = _channel_attention_two_pass(x, w1, w2, vmem_ceiling)
        return out.reshape(b, c, h, w)

    bb = _choose_bb(b, c, hw)
    block_bytes = bb * c * hw * 4
    vmem_limit = int(min(max(32 << 20, 4 * block_bytes + 2 * weight_bytes + (4 << 20)),
                         vmem_ceiling))

    out = pl.pallas_call(
        _make_main_kernel(bb),
        out_shape=jax.ShapeDtypeStruct((b, c, hw), x.dtype),
        grid_spec=pltpu.PrefetchScalarGridSpec(
            num_scalar_prefetch=0,
            grid=(b // bb,),
            in_specs=[
                pl.BlockSpec((bb, c, hw), lambda i: (i, 0, 0)),
                # Grid-invariant weights: constant index_map -> no per-step re-DMA.
                pl.BlockSpec(w1.shape, lambda i: (0, 0)),
                pl.BlockSpec(w2.shape, lambda i: (0, 0)),
            ],
            out_specs=pl.BlockSpec((bb, c, hw), lambda i: (i, 0, 0)),
        ),
        compiler_params=pltpu.CompilerParams(
            dimension_semantics=("parallel",),
            vmem_limit_bytes=vmem_limit,
        ),
    )(x, w1, w2)
    return out.reshape(b, c, h, w)


def channel_attention_ref(x, w1, w2):
    avg = jnp.mean(x, axis=(2, 3))
    mx = jnp.max(x, axis=(2, 3))

    def fc(y):
        return jnp.maximum(y @ w1.T, 0.0) @ w2.T

    att = jax.nn.sigmoid(fc(avg) + fc(mx))[:, :, None, None]
    return x * att


if __name__ == "__main__":
    C, reduction = 64, 16
    hidden = C // reduction  # 4

    key = jax.random.PRNGKey(0)
    k1, k2, kx1, kx2, kx3 = jax.random.split(key, 5)
    w1 = jax.random.normal(k1, (hidden, C), dtype=jnp.float32) * (1.0 / jnp.sqrt(C))
    w2 = jax.random.normal(k2, (C, hidden), dtype=jnp.float32) * (1.0 / jnp.sqrt(hidden))

    # Case 1: B=4, HW=256 -> batched blocks (bb=2, grid of 2 parallel steps).
    x1 = jax.random.normal(kx1, (4, C, 16, 16), dtype=jnp.float32)
    o1 = jax.block_until_ready(channel_attention(x1, w1, w2))
    r1 = channel_attention_ref(x1, w1, w2)
    assert o1.shape == x1.shape
    assert jnp.allclose(o1, r1, atol=1e-5, rtol=1e-5), "mismatch (batched-block path)"

    # Case 2: ragged HW (20*26 = 520 lanes) -> streaming chunk loop + masked tail store.
    x2 = jax.random.normal(kx2, (2, C, 20, 26), dtype=jnp.float32)
    o2 = jax.block_until_ready(channel_attention(x2, w1, w2))
    r2 = channel_attention_ref(x2, w1, w2)
    assert jnp.allclose(o2, r2, atol=1e-5, rtol=1e-5), "mismatch (ragged-HW path)"

    # Case 3: exercise the two-pass fallback used when a (C, HW) slab would not fit VMEM.
    x3 = jax.random.normal(kx3, (2, C, 16, 16), dtype=jnp.float32)
    o3 = jax.block_until_ready(channel_attention(x3, w1, w2, force_two_pass=True))
    r3 = channel_attention_ref(x3, w1, w2)
    assert jnp.allclose(o3, r3, atol=1e-5, rtol=1e-5), "mismatch (two-pass fallback)"

    print("KERNEL_OK")
</pallas_src>

<mosaic_0001>
module attributes {stable_mosaic.version = 11 : i64} {
  func.func @kernel(%arg0: i32, %arg1: memref<2x64x256xf32, #tpu.memory_space<vmem>>, %arg2: memref<4x64xf32, #tpu.memory_space<vmem>>, %arg3: memref<64x4xf32, #tpu.memory_space<vmem>>, %arg4: memref<2x64x256xf32, #tpu.memory_space<vmem>>) attributes {dimension_semantics = [#tpu.dimension_semantics<parallel>], iteration_bounds = array<i64: 2>, scalar_prefetch = 0 : i64, scratch_operands = 0 : i64, tpu.core_type = #tpu.core_type<tc>, window_params = [{transform_indices = @transform_0, window_bounds = array<i64: 2, 64, 256>}, {pipeline_mode = #tpu.pipeline_mode<synchronous>, transform_indices = @transform_1, window_bounds = array<i64: 4, 64>}, {pipeline_mode = #tpu.pipeline_mode<synchronous>, transform_indices = @transform_2, window_bounds = array<i64: 64, 4>}, {transform_indices = @transform_3, window_bounds = array<i64: 2, 64, 256>}]} {
    %cst = arith.constant 0.000000e+00 : f32
    %0 = vector.broadcast %cst : f32 to vector<2x64x1xf32>
    %cst_0 = arith.constant 0xFF800000 : f32
    %1 = vector.broadcast %cst_0 : f32 to vector<2x64x1xf32>
    %c0_i32 = arith.constant 0 : i32
    %c256_i32 = arith.constant 256 : i32
    %2 = arith.muli %c0_i32, %c256_i32 : i32
    %3 = tpu.assume_multiple %2, 256 : i32
    %c0 = arith.constant 0 : index
    %c0_1 = arith.constant 0 : index
    %4 = arith.index_cast %3 : i32 to index
    %5 = vector.load %arg1[%c0, %c0_1, %4] : memref<2x64x256xf32, #tpu.memory_space<vmem>>, vector<2x64x256xf32>
    %cst_2 = arith.constant dense<0.000000e+00> : vector<2x64xf32>
    %6 = vector.multi_reduction <add>, %5, %cst_2 [2] : vector<2x64x256xf32> to vector<2x64xf32>
    %7 = vector.shape_cast %6 : vector<2x64xf32> to vector<2x64x1xf32>
    %8 = arith.addf %0, %7 : vector<2x64x1xf32>
    %cst_3 = arith.constant dense<0xFF800000> : vector<2x64xf32>
    %9 = vector.multi_reduction <maximumf>, %5, %cst_3 [2] : vector<2x64x256xf32> to vector<2x64xf32>
    %10 = vector.shape_cast %9 : vector<2x64xf32> to vector<2x64x1xf32>
    %11 = arith.maximumf %1, %10 : vector<2x64x1xf32>
    %c1_i32 = arith.constant 1 : i32
    %cst_4 = arith.constant 3.906250e-03 : f32
    %12 = vector.broadcast %cst_4 : f32 to vector<2x64x1xf32>
    %13 = arith.mulf %8, %12 : vector<2x64x1xf32>
    %14 = vector.extract_strided_slice %13 {offsets = [0, 0, 0], sizes = [1, 64, 1], strides = [1, 1, 1]} : vector<2x64x1xf32> to vector<1x64x1xf32>
    %15 = vector.shape_cast %14 : vector<1x64x1xf32> to vector<64x1xf32>
    %16 = vector.extract_strided_slice %13 {offsets = [1, 0, 0], sizes = [1, 64, 1], strides = [1, 1, 1]} : vector<2x64x1xf32> to vector<1x64x1xf32>
    %17 = vector.shape_cast %16 : vector<1x64x1xf32> to vector<64x1xf32>
    %18 = vector.extract_strided_slice %11 {offsets = [0, 0, 0], sizes = [1, 64, 1], strides = [1, 1, 1]} : vector<2x64x1xf32> to vector<1x64x1xf32>
    %19 = vector.shape_cast %18 : vector<1x64x1xf32> to vector<64x1xf32>
    %20 = vector.extract_strided_slice %11 {offsets = [1, 0, 0], sizes = [1, 64, 1], strides = [1, 1, 1]} : vector<2x64x1xf32> to vector<1x64x1xf32>
    %21 = vector.shape_cast %20 : vector<1x64x1xf32> to vector<64x1xf32>
    %22 = tpu.concatenate %15, %17, %19, %21 in 1 : vector<64x1xf32>, vector<64x1xf32>, vector<64x1xf32>, vector<64x1xf32> -> vector<64x4xf32>
    %c0_5 = arith.constant 0 : index
    %c0_6 = arith.constant 0 : index
    %23 = vector.load %arg2[%c0_5, %c0_6] : memref<4x64xf32, #tpu.memory_space<vmem>>, vector<4x64xf32>
    %cst_7 = arith.constant dense<0.000000e+00> : vector<4x4xf32>
    %24 = tpu.matmul %23, %22, %cst_7 {dimension_numbers = #tpu.dot_dimension_numbers<[1], [0], [0], [1], [0, 0, 1, 1], [], []>} : vector<4x64xf32>, vector<64x4xf32>, vector<4x4xf32> -> vector<4x4xf32>
    %cst_8 = arith.constant 0.000000e+00 : f32
    %25 = vector.broadcast %cst_8 : f32 to vector<4x4xf32>
    %26 = arith.maximumf %24, %25 : vector<4x4xf32>
    %c0_9 = arith.constant 0 : index
    %c0_10 = arith.constant 0 : index
    %27 = vector.load %arg3[%c0_9, %c0_10] : memref<64x4xf32, #tpu.memory_space<vmem>>, vector<64x4xf32>
    %cst_11 = arith.constant dense<0.000000e+00> : vector<64x4xf32>
    %28 = tpu.matmul %27, %26, %cst_11 {dimension_numbers = #tpu.dot_dimension_numbers<[1], [0], [0], [1], [0, 0, 1, 1], [], []>} : vector<64x4xf32>, vector<4x4xf32>, vector<64x4xf32> -> vector<64x4xf32>
    %29 = vector.extract_strided_slice %28 {offsets = [0, 0], sizes = [64, 2], strides = [1, 1]} : vector<64x4xf32> to vector<64x2xf32>
    %30 = vector.extract_strided_slice %28 {offsets = [0, 2], sizes = [64, 2], strides = [1, 1]} : vector<64x4xf32> to vector<64x2xf32>
    %31 = arith.addf %29, %30 : vector<64x2xf32>
    %32 = arith.negf %31 : vector<64x2xf32>
    %33 = math.exp %32 : vector<64x2xf32>
    %cst_12 = arith.constant 1.000000e+00 : f32
    %34 = vector.broadcast %cst_12 : f32 to vector<64x2xf32>
    %35 = arith.addf %34, %33 : vector<64x2xf32>
    %36 = arith.divf %34, %35 : vector<64x2xf32>
    %37 = vector.extract_strided_slice %36 {offsets = [0, 0], sizes = [64, 1], strides = [1, 1]} : vector<64x2xf32> to vector<64x1xf32>
    %38 = vector.extract_strided_slice %36 {offsets = [0, 1], sizes = [64, 1], strides = [1, 1]} : vector<64x2xf32> to vector<64x1xf32>
    %39 = vector.shape_cast %37 : vector<64x1xf32> to vector<1x64x1xf32>
    %40 = vector.shape_cast %38 : vector<64x1xf32> to vector<1x64x1xf32>
    %41 = tpu.concatenate %39, %40 in 0 : vector<1x64x1xf32>, vector<1x64x1xf32> -> vector<2x64x1xf32>
    %c0_i32_13 = arith.constant 0 : i32
    %c256_i32_14 = arith.constant 256 : i32
    %42 = arith.muli %c0_i32_13, %c256_i32_14 : i32
    %43 = tpu.assume_multiple %42, 256 : i32
    %c0_15 = arith.constant 0 : index
    %c0_16 = arith.constant 0 : index
    %44 = arith.index_cast %43 : i32 to index
    %45 = vector.load %arg1[%c0_15, %c0_16, %44] : memref<2x64x256xf32, #tpu.memory_space<vmem>>, vector<2x64x256xf32>
    %46 = vector.broadcast %41 : vector<2x64x1xf32> to vector<2x64x256xf32>
    %47 = arith.mulf %45, %46 : vector<2x64x256xf32>
    %c0_17 = arith.constant 0 : index
    %c0_18 = arith.constant 0 : index
    %48 = arith.index_cast %43 : i32 to index
    %49 = vector.load %arg4[%c0_17, %c0_18, %48] : memref<2x64x256xf32, #tpu.memory_space<vmem>>, vector<2x64x256xf32>
    tpu.vector_store %arg4[%c0_17, %c0_18, %48], %47 {strides = array<i32>} : memref<2x64x256xf32, #tpu.memory_space<vmem>>, vector<2x64x256xf32>,
    %c1_i32_19 = arith.constant 1 : i32
    return
  }
  func.func @transform_0(%arg0: i32) -> (i32, i32, i32) {
    %c0_i32 = arith.constant 0 : i32
    %c0_i32_0 = arith.constant 0 : i32
    %c0_i32_1 = arith.constant 0 : i32
    return %arg0, %c0_i32, %c0_i32_0 : i32, i32, i32
  }
  func.func @transform_1(%arg0: i32) -> (i32, i32) {
    %c0_i32 = arith.constant 0 : i32
    %c0_i32_0 = arith.constant 0 : i32
    %c0_i32_1 = arith.constant 0 : i32
    return %c0_i32, %c0_i32_0 : i32, i32
  }
  func.func @transform_2(%arg0: i32) -> (i32, i32) {
    %c0_i32 = arith.constant 0 : i32
    %c0_i32_0 = arith.constant 0 : i32
    %c0_i32_1 = arith.constant 0 : i32
    return %c0_i32, %c0_i32_0 : i32, i32
  }
  func.func @transform_3(%arg0: i32) -> (i32, i32, i32) {
    %c0_i32 = arith.constant 0 : i32
    %c0_i32_0 = arith.constant 0 : i32
    %c0_i32_1 = arith.constant 0 : i32
    return %arg0, %c0_i32, %c0_i32_0 : i32, i32, i32
  }
}

</mosaic_0001>

<llo_original>
// kernel: tpu_custom_call.1
$region0: #{tpu_custom_call.1}
  #allocation0 [shape = 'u32[]', space=smem, size = 0x4, offset = 0x4, fixed_abs, tag = 'smem constant byte address 0x4 - core index']
  #allocation1 [shape = 'u32[144,128]{1,0:T(1,128)}', space=vmem, size = 0x12000, scoped, tag = 'internal scratch']
  %s0 = inlined_call_operand.hbm [shape: f32[4,64,256], index: 0, kind: input, shape index: {}]
  %s1 = inlined_call_operand.vmem [shape: f32[4,64], index: 1, kind: input, shape index: {}]
  %s2 = inlined_call_operand.vmem [shape: f32[64,4], index: 2, kind: input, shape index: {}]
  %s3 = inlined_call_operand.hbm [shape: f32[4,64,256], index: 3, kind: output, shape index: {}]
  %s4 = sld [smem:[#allocation0]]
  $region49: #{tpu_custom_call.1} parent=0
    _
  %s6 = ssub.s32 1, %s4
  %s7 = scalar_select 0, %s6, %s4
  $region1: #{tpu_custom_call.1} parent=0
    #allocation2 [shape = 'u8[262144]{0}', space=vmem, size = 0x40000, scoped, tag = 'input window, operand 0']
    #allocation3 [shape = 's32[2]{0}', space=sflag, size = 0x8, scoped, tag = 'scoped memory for tpu_custom_call.1']
    #allocation4 [shape = 's32[2]{0}', space=sflag, size = 0x8, scoped, tag = 'scoped memory for tpu_custom_call.1']
    #allocation5 [shape = 'u8[262144]{0}', space=vmem, size = 0x40000, scoped, tag = 'output window, operand 0']
    %8 = vsyncpa [#allocation3], 0
    %s9 = scalar_lea.sflag [#allocation3], 1
    %10 = vsyncpa %s9, 0
    %11 = vsyncpa [#allocation4], 0
    %s12 = scalar_lea.sflag [#allocation4], 1
    %13 = vsyncpa %s12, 0
    loop: start=0, step=1, limit=4
    $region2: #{tpu_custom_call.1} parent=1 // loop_pre_header
      _
    $region3: #{tpu_custom_call.1} parent=1 // loop_header
      %s15 = sphi 0, %s19
      %p16 = scmp.ge.s32.totalorder %s15, 4
      %s25 = sphi 0, %s27
      %s28 = sphi 0, %s25
      %s29 = sphi 0, %s28
      %s45 = sphi 0, %s29
      %s49 = sphi 0, %s49
      %s51 = sphi 0, %s49
      %s52 = sphi 0, %s51
      %s66 = sphi 0, %s52
      %s70 = sphi 0, %s70
      %s72 = sphi 0, %s70
      %s73 = sphi 0, %s72
      %s87 = sphi 0, %s73
      %s93 = sphi 0, %s95
      %s96 = sphi 0, %s93
      %s97 = sphi 0, %s96
      %s113 = sphi 0, %s97
    $region4: #{tpu_custom_call.1} parent=1 // loop_header_branch
      %18 = sbr.rel (%p16) target = $region8
    $region5: #{tpu_custom_call.1} parent=1 // loop_body
      %s20 = ssub.s32 %s15, 1
      %s21 = ssub.s32 %s15, 2
      %s22 = sadd.s32 %s15, 1
      %s23 = ssub.s32 %s15, %s22
      %p24 = scmp.eq.s32.totalorder %s23, 0
      %s26 = sadd.s32 %s25, 1
      %s27 = scalar_select %p24, %s25, %s26
      %p30 = pneg %p24
      %p31 = scmp.eq.s32.totalorder %s15, 1
      %p32 = por %p30, %p31
      %p33 = scmp.ne.s32.totalorder %s25, %s28
      %p34 = scmp.eq.s32.totalorder %s15, 0
      %p35 = por %p33, %p34
      %p36 = scmp.ne.s32.totalorder %s25, %s28
      %p37 = scmp.eq.s32.totalorder %s20, 1
      %p38 = por %p36, %p37
      %p39 = scmp.ne.s32.totalorder %s28, %s29
      %p40 = scmp.eq.s32.totalorder %s20, 0
      %p41 = por %p39, %p40
      %p42 = scmp.ne.s32.totalorder %s28, %s29
      %p43 = scmp.eq.s32.totalorder %s21, 1
      %p44 = por %p42, %p43
      %p46 = scmp.ne.s32.totalorder %s29, %s45
      %p47 = scmp.eq.s32.totalorder %s21, 0
      %p48 = por %p46, %p47
      %s50 = sadd.s32 %s49, 1
      %p53 = scmp.eq.s32.totalorder %s15, 1
      %p54 = scmp.ne.s32.totalorder %s49, %s51
      %p55 = scmp.eq.s32.totalorder %s15, 0
      %p56 = por %p54, %p55
      %p57 = scmp.ne.s32.totalorder %s49, %s51
      %p58 = scmp.eq.s32.totalorder %s20, 1
      %p59 = por %p57, %p58
      %p60 = scmp.ne.s32.totalorder %s51, %s52
      %p61 = scmp.eq.s32.totalorder %s20, 0
      %p62 = por %p60, %p61
      %p63 = scmp.ne.s32.totalorder %s51, %s52
      %p64 = scmp.eq.s32.totalorder %s21, 1
      %p65 = por %p63, %p64
      %p67 = scmp.ne.s32.totalorder %s52, %s66
      %p68 = scmp.eq.s32.totalorder %s21, 0
      %p69 = por %p67, %p68
      %s71 = sadd.s32 %s70, 1
      %p74 = scmp.eq.s32.totalorder %s15, 1
      %p75 = scmp.ne.s32.totalorder %s70, %s72
      %p76 = scmp.eq.s32.totalorder %s15, 0
      %p77 = por %p75, %p76
      %p78 = scmp.ne.s32.totalorder %s70, %s72
      %p79 = scmp.eq.s32.totalorder %s20, 1
      %p80 = por %p78, %p79
      %p81 = scmp.ne.s32.totalorder %s72, %s73
      %p82 = scmp.eq.s32.totalorder %s20, 0
      %p83 = por %p81, %p82
      %p84 = scmp.ne.s32.totalorder %s72, %s73
      %p85 = scmp.eq.s32.totalorder %s21, 1
      %p86 = por %p84, %p85
      %p88 = scmp.ne.s32.totalorder %s73, %s87
      %p89 = scmp.eq.s32.totalorder %s21, 0
      %p90 = por %p88, %p89
      %s91 = ssub.s32 %s15, %s22
      %p92 = scmp.eq.s32.totalorder %s91, 0
      %s94 = sadd.s32 %s93, 1
      %s95 = scalar_select %p92, %s93, %s94
      %p98 = pneg %p92
      %p99 = scmp.eq.s32.totalorder %s15, 1
      %p100 = por %p98, %p99
      %p101 = scmp.ne.s32.totalorder %s93, %s96
      %p102 = scmp.eq.s32.totalorder %s15, 0
      %p103 = por %p101, %p102
      %p104 = scmp.ne.s32.totalorder %s93, %s96
      %p105 = scmp.eq.s32.totalorder %s20, 1
      %p106 = por %p104, %p105
      %p107 = scmp.ne.s32.totalorder %s96, %s97
      %p108 = scmp.eq.s32.totalorder %s20, 0
      %p109 = por %p107, %p108
      %p110 = scmp.ne.s32.totalorder %s96, %s97
      %p111 = scmp.eq.s32.totalorder %s21, 1
      %p112 = por %p110, %p111
      %p114 = scmp.ne.s32.totalorder %s97, %s113
      %p115 = scmp.eq.s32.totalorder %s21, 0
      %p116 = por %p114, %p115
      %p117 = scmp.le.s32.totalorder 1, %s15
      %p118 = scmp.lt.s32.totalorder %s15, 3
      %p119 = pnand %p117, %p118
      %p120 = pneg %p119
      // Predicated region
      $region9: #{tpu_custom_call.1} parent=5 // pred_check
        _
      $region10: #{tpu_custom_call.1} parent=5 // pred_check_branch
        %122 = sbr.rel (%p119) target = $region12
      $region11: #{tpu_custom_call.1} parent=5 // pred_region
        %s123 = ssub.s32 %s15, 1
        // Predicated region
        $region13: #{tpu_custom_call.1} parent=11 // pred_check
          %p124 = pneg %p62
        $region14: #{tpu_custom_call.1} parent=11 // pred_check_branch
          %126 = sbr.rel (%p124) target = $region16
        $region15: #{tpu_custom_call.1} parent=11 // pred_region
          _
        $region16: #{tpu_custom_call.1} parent=11 // pred_fallthru
          _
        // Predicated region
        $region17: #{tpu_custom_call.1} parent=11 // pred_check
          %p127 = pneg %p83
        $region18: #{tpu_custom_call.1} parent=11 // pred_check_branch
          %129 = sbr.rel (%p127) target = $region20
        $region19: #{tpu_custom_call.1} parent=11 // pred_region
          _
        $region20: #{tpu_custom_call.1} parent=11 // pred_fallthru
          _
      $region12: #{tpu_custom_call.1} parent=5 // pred_fallthru
        _
      %p130 = scmp.lt.s32.totalorder %s15, 2
      // Predicated region
      $region21: #{tpu_custom_call.1} parent=5 // pred_check
        %p131 = pneg %p130
      $region22: #{tpu_custom_call.1} parent=5 // pred_check_branch
        %133 = sbr.rel (%p131) target = $region24
      $region23: #{tpu_custom_call.1} parent=5 // pred_region
        // Predicated region
        $region25: #{tpu_custom_call.1} parent=23 // pred_check
          %p134 = pneg %p35
        $region26: #{tpu_custom_call.1} parent=23 // pred_check_branch
          %136 = sbr.rel (%p134) target = $region28
        $region27: #{tpu_custom_call.1} parent=23 // pred_region
          %s137 = sand.u32 %s25, 1
          %s138 = scalar_lea.sflag [#allocation3], %s137
          %s139 = sand.u32 %s25, 1
          %s140 = smul.addr %s139, 256
          %s141 = scalar_lea.vmem [#allocation2], %s140
          %s142 = smul.u32 2, %s15
          %s144 = ssub.s32 4096, 4096
          %145 = vsyncadd %s138, %s144
          %s146 = smul.addr %s142, 16
          %s147 = smul.addr %s146, 128
          %s148 = scalar_lea.hbm %s0, %s147
          %s149 = sshll.u32 %s141, 4
          %s150 = int_to_ptr.vmem [resolvable:$true] %s149
          %155 = dma.hbm_to_vmem [thread:$0]  %s148, 4096, %s150, %s138, 256, 256, 16
        $region28: #{tpu_custom_call.1} parent=23 // pred_fallthru
          _
      $region24: #{tpu_custom_call.1} parent=5 // pred_fallthru
        _
      %p156 = scmp.le.s32.totalorder 1, %s15
      %p157 = scmp.lt.s32.totalorder %s15, 3
      %p158 = pnand %p156, %p157
      %p159 = pneg %p158
      // Predicated region
      $region29: #{tpu_custom_call.1} parent=5 // pred_check
        _
      $region30: #{tpu_custom_call.1} parent=5 // pred_check_branch
        %161 = sbr.rel (%p158) target = $region32
      $region31: #{tpu_custom_call.1} parent=5 // pred_region
        %s162 = ssub.s32 %s15, 1
        %s163 = sand.u32 %s28, 1
        %s164 = scalar_lea.sflag [#allocation3], %s163
        %s165 = sand.u32 %s28, 1
        %s166 = smul.addr %s165, 256
        %s167 = scalar_lea.vmem [#allocation2], %s166
        // Predicated region
        $region33: #{tpu_custom_call.1} parent=31 // pred_check
          %p168 = pneg %p41
        $region34: #{tpu_custom_call.1} parent=31 // pred_check_branch
          %170 = sbr.rel (%p168) target = $region36
        $region35: #{tpu_custom_call.1} parent=31 // pred_region
          %171 = dma.done %s164, 4096
        $region36: #{tpu_custom_call.1} parent=31 // pred_fallthru
          _
        %s172 = sand.u32 %s28, 1
        %s173 = scalar_lea.sflag [#allocation3], %s172
        %s174 = sand.u32 %s28, 1
        %s175 = smul.addr %s174, 256
        %s176 = scalar_lea.vmem [#allocation2], %s175
        %p177 = pneg %p41
        %p178 = pneg %p38
        %p179 = pneg %p62
        %p180 = pneg %p59
        %p181 = pneg %p83
        %p182 = pneg %p80
        %p183 = pneg %p109
        %p184 = pneg %p106
        %s185 = sand.u32 %s96, 1
        %s186 = scalar_lea.sflag [#allocation4], %s185
        %s187 = sand.u32 %s96, 1
        %s188 = smul.addr %s187, 256
        %s189 = scalar_lea.vmem [#allocation5], %s188
        %s190 = smul.u32 2, %s20
        %s191 = smul.u32 2, %s20
        %v192 = vld [vmem:[%s167] sm:$0xff]
        %v193 = vld [vmem:[%s167 + $0x8] sm:$0xff]
        %v194 = vld [vmem:[%s167 + $0x10] sm:$0xff]
        %v195 = vld [vmem:[%s167 + $0x18] sm:$0xff]
        %v196 = vld [vmem:[%s167 + $0x20] sm:$0xff]
        %v197 = vld [vmem:[%s167 + $0x28] sm:$0xff]
        %v198 = vld [vmem:[%s167 + $0x30] sm:$0xff]
        %v199 = vld [vmem:[%s167 + $0x38] sm:$0xff]
        %v200 = vld [vmem:[%s167 + $0x40] sm:$0xff]
        %v201 = vld [vmem:[%s167 + $0x48] sm:$0xff]
        %v202 = vld [vmem:[%s167 + $0x50] sm:$0xff]
        %v203 = vld [vmem:[%s167 + $0x58] sm:$0xff]
        %v204 = vld [vmem:[%s167 + $0x60] sm:$0xff]
        %v205 = vld [vmem:[%s167 + $0x68] sm:$0xff]
        %v206 = vld [vmem:[%s167 + $0x70] sm:$0xff]
        %v207 = vld [vmem:[%s167 + $0x78] sm:$0xff]
        %v208 = vld [vmem:[%s167 + $0x80] sm:$0xff]
        %v209 = vld [vmem:[%s167 + $0x88] sm:$0xff]
        %v210 = vld [vmem:[%s167 + $0x90] sm:$0xff]
        %v211 = vld [vmem:[%s167 + $0x98] sm:$0xff]
        %v212 = vld [vmem:[%s167 + $0xa0] sm:$0xff]
        %v213 = vld [vmem:[%s167 + $0xa8] sm:$0xff]
        %v214 = vld [vmem:[%s167 + $0xb0] sm:$0xff]
        %v215 = vld [vmem:[%s167 + $0xb8] sm:$0xff]
        %v216 = vld [vmem:[%s167 + $0xc0] sm:$0xff]
        %v217 = vld [vmem:[%s167 + $0xc8] sm:$0xff]
        %v218 = vld [vmem:[%s167 + $0xd0] sm:$0xff]
        %v219 = vld [vmem:[%s167 + $0xd8] sm:$0xff]
        %v220 = vld [vmem:[%s167 + $0xe0] sm:$0xff]
        %v221 = vld [vmem:[%s167 + $0xe8] sm:$0xff]
        %v222 = vld [vmem:[%s167 + $0xf0] sm:$0xff]
        %v223 = vld [vmem:[%s167 + $0xf8] sm:$0xff]
        %v224 = vadd.f32 %v192, %v193
        %225 = vadd.xlane.f32.xlu0 %v224
        %v226 = vpop.xlane.xlu0 %225
        %v227 = vadd.f32 %v194, %v195
        %228 = vadd.xlane.f32.xlu0 %v227
        %v229 = vpop.xlane.xlu0 %228
        %v230 = vadd.f32 %v196, %v197
        %231 = vadd.xlane.f32.xlu0 %v230
        %v232 = vpop.xlane.xlu0 %231
        %v233 = vadd.f32 %v198, %v199
        %234 = vadd.xlane.f32.xlu0 %v233
        %v235 = vpop.xlane.xlu0 %234
        %v236 = vadd.f32 %v200, %v201
        %237 = vadd.xlane.f32.xlu0 %v236
        %v238 = vpop.xlane.xlu0 %237
        %v239 = vadd.f32 %v202, %v203
        %240 = vadd.xlane.f32.xlu0 %v239
        %v241 = vpop.xlane.xlu0 %240
        %v242 = vadd.f32 %v204, %v205
        %243 = vadd.xlane.f32.xlu0 %v242
        %v244 = vpop.xlane.xlu0 %243
        %v245 = vadd.f32 %v206, %v207
        %246 = vadd.xlane.f32.xlu0 %v245
        %v247 = vpop.xlane.xlu0 %246
        %v248 = vadd.f32 %v208, %v209
        %249 = vadd.xlane.f32.xlu0 %v248
        %v250 = vpop.xlane.xlu0 %249
        %v251 = vadd.f32 %v210, %v211
        %252 = vadd.xlane.f32.xlu0 %v251
        %v253 = vpop.xlane.xlu0 %252
        %v254 = vadd.f32 %v212, %v213
        %255 = vadd.xlane.f32.xlu0 %v254
        %v256 = vpop.xlane.xlu0 %255
        %v257 = vadd.f32 %v214, %v215
        %258 = vadd.xlane.f32.xlu0 %v257
        %v259 = vpop.xlane.xlu0 %258
        %v260 = vadd.f32 %v216, %v217
        %261 = vadd.xlane.f32.xlu0 %v260
        %v262 = vpop.xlane.xlu0 %261
        %v263 = vadd.f32 %v218, %v219
        %264 = vadd.xlane.f32.xlu0 %v263
        %v265 = vpop.xlane.xlu0 %264
        %v266 = vadd.f32 %v220, %v221
        %267 = vadd.xlane.f32.xlu0 %v266
        %v268 = vpop.xlane.xlu0 %267
        %v269 = vadd.f32 %v222, %v223
        %270 = vadd.xlane.f32.xlu0 %v269
        %v271 = vpop.xlane.xlu0 %270
        %v272 = vadd.f32 %v226, 0.0
        %v273 = vadd.f32 %v229, 0.0
        %v274 = vadd.f32 %v232, 0.0
        %v275 = vadd.f32 %v235, 0.0
        %v276 = vadd.f32 %v238, 0.0
        %v277 = vadd.f32 %v241, 0.0
        %v278 = vadd.f32 %v244, 0.0
        %v279 = vadd.f32 %v247, 0.0
        %v280 = vadd.f32 %v250, 0.0
        %v281 = vadd.f32 %v253, 0.0
        %v282 = vadd.f32 %v256, 0.0
        %v283 = vadd.f32 %v259, 0.0
        %v284 = vadd.f32 %v262, 0.0
        %v285 = vadd.f32 %v265, 0.0
        %v286 = vadd.f32 %v268, 0.0
        %v287 = vadd.f32 %v271, 0.0
        %v288 = vmax.f32 %v192, %v193
        %289 = vmax.xlane.f32.xlu0 %v288
        %v290 = vpop.xlane.xlu0 %289
        %v291 = vmax.f32 %v194, %v195
        %292 = vmax.xlane.f32.xlu0 %v291
        %v293 = vpop.xlane.xlu0 %292
        %v294 = vmax.f32 %v196, %v197
        %295 = vmax.xlane.f32.xlu0 %v294
        %v296 = vpop.xlane.xlu0 %295
        %v297 = vmax.f32 %v198, %v199
        %298 = vmax.xlane.f32.xlu0 %v297
        %v299 = vpop.xlane.xlu0 %298
        %v300 = vmax.f32 %v200, %v201
        %301 = vmax.xlane.f32.xlu0 %v300
        %v302 = vpop.xlane.xlu0 %301
        %v303 = vmax.f32 %v202, %v203
        %304 = vmax.xlane.f32.xlu0 %v303
        %v305 = vpop.xlane.xlu0 %304
        %v306 = vmax.f32 %v204, %v205
        %307 = vmax.xlane.f32.xlu0 %v306
        %v308 = vpop.xlane.xlu0 %307
        %v309 = vmax.f32 %v206, %v207
        %310 = vmax.xlane.f32.xlu0 %v309
        %v311 = vpop.xlane.xlu0 %310
        %v312 = vmax.f32 %v208, %v209
        %313 = vmax.xlane.f32.xlu0 %v312
        %v314 = vpop.xlane.xlu0 %313
        %v315 = vmax.f32 %v210, %v211
        %316 = vmax.xlane.f32.xlu0 %v315
        %v317 = vpop.xlane.xlu0 %316
        %v318 = vmax.f32 %v212, %v213
        %319 = vmax.xlane.f32.xlu0 %v318
        %v320 = vpop.xlane.xlu0 %319
        %v321 = vmax.f32 %v214, %v215
        %322 = vmax.xlane.f32.xlu0 %v321
        %v323 = vpop.xlane.xlu0 %322
        %v324 = vmax.f32 %v216, %v217
        %325 = vmax.xlane.f32.xlu0 %v324
        %v326 = vpop.xlane.xlu0 %325
        %v327 = vmax.f32 %v218, %v219
        %328 = vmax.xlane.f32.xlu0 %v327
        %v329 = vpop.xlane.xlu0 %328
        %v330 = vmax.f32 %v220, %v221
        %331 = vmax.xlane.f32.xlu0 %v330
        %v332 = vpop.xlane.xlu0 %331
        %v333 = vmax.f32 %v222, %v223
        %334 = vmax.xlane.f32.xlu0 %v333
        %v335 = vpop.xlane.xlu0 %334
        %v336 = vmul.f32 %v272, 0.00390625
        %v337 = vmul.f32 %v273, 0.00390625
        %v338 = vmul.f32 %v274, 0.00390625
        %v339 = vmul.f32 %v275, 0.00390625
        %v340 = vmul.f32 %v276, 0.00390625
        %v341 = vmul.f32 %v277, 0.00390625
        %v342 = vmul.f32 %v278, 0.00390625
        %v343 = vmul.f32 %v279, 0.00390625
        %v344 = vmul.f32 %v280, 0.00390625
        %v345 = vmul.f32 %v281, 0.00390625
        %v346 = vmul.f32 %v282, 0.00390625
        %v347 = vmul.f32 %v283, 0.00390625
        %v348 = vmul.f32 %v284, 0.00390625
        %v349 = vmul.f32 %v285, 0.00390625
        %v350 = vmul.f32 %v286, 0.00390625
        %v351 = vmul.f32 %v287, 0.00390625
        %vm352 = vcmask 7168
        %v353 = vsel %vm352, %v336, %v344
        %v354 = vsel %vm352, %v337, %v345
        %v355 = vsel %vm352, %v338, %v346
        %v356 = vsel %vm352, %v339, %v347
        %v357 = vsel %vm352, %v340, %v348
        %v358 = vsel %vm352, %v341, %v349
        %v359 = vsel %vm352, %v342, %v350
        %v360 = vsel %vm352, %v343, %v351
        %vm361 = vcmask 15360
        %v362 = vsel %vm361, %v353, %v290
        %v363 = vsel %vm361, %v354, %v293
        %v364 = vsel %vm361, %v355, %v296
        %v365 = vsel %vm361, %v356, %v299
        %v366 = vsel %vm361, %v357, %v302
        %v367 = vsel %vm361, %v358, %v305
        %v368 = vsel %vm361, %v359, %v308
        %v369 = vsel %vm361, %v360, %v311
        %vm370 = vcmask 23552
        %v371 = vsel %vm370, %v362, %v314
        %v372 = vsel %vm370, %v363, %v317
        %v373 = vsel %vm370, %v364, %v320
        %v374 = vsel %vm370, %v365, %v323
        %v375 = vsel %vm370, %v366, %v326
        %v376 = vsel %vm370, %v367, %v329
        %v377 = vsel %vm370, %v368, %v332
        %v378 = vsel %vm370, %v369, %v335
        %v379 = vld [vmem:[%s1] sm:$0xf]
        %vm380 = vcmask 523264
        %v382 = vsel %vm380, %v379, 0
        %384 = vmatprep.subr.mxu0 0.0
        %385 = vmatpush1.msra.mxu0 %v371
        %386 = vmatprep.subr.mxu0 0.0
        %387 = vmatpush1.msra.mxu0 %v372
        %388 = vmatprep.subr.mxu0 0.0
        %389 = vmatpush1.msra.mxu0 %v373
        %390 = vmatprep.subr.mxu0 0.0
        %391 = vmatpush1.msra.mxu0 %v374
        %392 = vmatprep.subr.mxu0 0.0
        %393 = vmatpush1.msra.mxu0 %v375
        %394 = vmatprep.subr.mxu0 0.0
        %395 = vmatpush1.msra.mxu0 %v376
        %396 = vmatprep.subr.mxu0 0.0
        %397 = vmatpush1.msra.mxu0 %v377
        %398 = vmatprep.subr.mxu0 0.0
        %399 = vmatpush1.msra.mxu0 %v378
        %400 = vmatprep.subr.mxu0 0.0
        %401 = vmatpush1.msra.mxu0 0.0
        %402 = vmatprep.subr.mxu0 0.0
        %403 = vmatpush1.msra.mxu0 0.0
        %404 = vmatprep.subr.mxu0 0.0
        %405 = vmatpush1.msra.mxu0 0.0
        %406 = vmatprep.subr.mxu0 0.0
        %407 = vmatpush1.msra.mxu0 0.0
        %408 = vmatprep.subr.mxu0 0.0
        %409 = vmatpush1.msra.mxu0 0.0
        %410 = vmatprep.subr.mxu0 0.0
        %411 = vmatpush1.msra.mxu0 0.0
        %412 = vmatprep.subr.mxu0 0.0
        %413 = vmatpush1.msra.mxu0 0.0
        %414 = vmatprep.subr.mxu0 0.0
        %415 = vmatpush1.msra.mxu0 0.0
        %416 = vmatprep.subr.mxu0 0.0
        %417 = vmatpush1.msra.mxu0 0.0
        %418 = vmatprep.subr.mxu0 0.0
        %419 = vmatpush1.msra.mxu0 0.0
        %420 = vmatprep.subr.mxu0 0.0
        %421 = vmatpush1.msra.mxu0 0.0
        %422 = vmatprep.subr.mxu0 0.0
        %423 = vmatpush1.msra.mxu0 0.0
        %424 = vmatprep.subr.mxu0 0.0
        %425 = vmatpush1.msra.mxu0 0.0
        %426 = vmatprep.subr.mxu0 0.0
        %427 = vmatpush1.msra.mxu0 0.0
        %428 = vmatprep.subr.mxu0 0.0
        %429 = vmatpush1.msra.mxu0 0.0
        %430 = vmatprep.subr.mxu0 0.0
        %431 = vmatpush1.msra.mxu0 0.0
        %432 = vmatprep.subr.mxu0 0.0
        %433 = vmatpush1.msra.mxu0 0.0
        %434 = vmatprep.subr.mxu0 0.0
        %435 = vmatpush1.msra.mxu0 0.0
        %436 = vmatprep.subr.mxu0 0.0
        %437 = vmatpush1.msra.mxu0 0.0
        %438 = vmatprep.subr.mxu0 0.0
        %439 = vmatpush1.msra.mxu0 0.0
        %440 = vmatprep.subr.mxu0 0.0
        %441 = vmatpush1.msra.mxu0 0.0
        %442 = vmatprep.subr.mxu0 0.0
        %443 = vmatpush1.msra.mxu0 0.0
        %444 = vmatprep.subr.mxu0 0.0
        %445 = vmatpush1.msra.mxu0 0.0
        %446 = vmatprep.subr.mxu0 0.0
        %447 = vmatpush1.msra.mxu0 0.0
        %448 = vmatprep.mubr.f32.mxu0 0.0
        %449 = vmatmul.mubr.f32.gmra.mrb[0].mxu0 %v382
        %v450 = vpop.f32.mrb[0].mxu0
        %v451 = vadd.f32 0.0, %v450
        %v452 = vpop.f32.mrb[0].mxu0
        %453 = vdwg.mxu0
        %v454 = vmax.f32 %v451, 0.0
        %v455 = vld [vmem:[%s2] sm:$0xff]
        %v456 = vld [vmem:[%s2 + $0x8] sm:$0xff]
        %v457 = vld [vmem:[%s2 + $0x10] sm:$0xff]
        %v458 = vld [vmem:[%s2 + $0x18] sm:$0xff]
        %v459 = vld [vmem:[%s2 + $0x20] sm:$0xff]
        %v460 = vld [vmem:[%s2 + $0x28] sm:$0xff]
        %v461 = vld [vmem:[%s2 + $0x30] sm:$0xff]
        %v462 = vld [vmem:[%s2 + $0x38] sm:$0xff]
        %vm463 = vcmask 31744
        %v465 = vsel %vm463, %v455, 0
        %v468 = vsel %vm463, %v456, 0
        %v471 = vsel %vm463, %v457, 0
        %v474 = vsel %vm463, %v458, 0
        %v477 = vsel %vm463, %v459, 0
        %v480 = vsel %vm463, %v460, 0
        %v483 = vsel %vm463, %v461, 0
        %v486 = vsel %vm463, %v462, 0
        %vm488 = vcmask 1043456
        %v490 = vsel %vm488, %v454, 0
        %492 = vmatprep.subr.mxu0 0.0
        %493 = vmatpush1.msra.mxu0 %v490
        %494 = vmatprep.subr.mxu0 0.0
        %495 = vmatpush1.msra.mxu0 0.0
        %496 = vmatprep.subr.mxu0 0.0
        %497 = vmatpush1.msra.mxu0 0.0
        %498 = vmatprep.subr.mxu0 0.0
        %499 = vmatpush1.msra.mxu0 0.0
        %500 = vmatprep.subr.mxu0 0.0
        %501 = vmatpush1.msra.mxu0 0.0
        %502 = vmatprep.subr.mxu0 0.0
        %503 = vmatpush1.msra.mxu0 0.0
        %504 = vmatprep.subr.mxu0 0.0
        %505 = vmatpush1.msra.mxu0 0.0
        %506 = vmatprep.subr.mxu0 0.0
        %507 = vmatpush1.msra.mxu0 0.0
        %508 = vmatprep.subr.mxu0 0.0
        %509 = vmatpush1.msra.mxu0 0.0
        %510 = vmatprep.subr.mxu0 0.0
        %511 = vmatpush1.msra.mxu0 0.0
        %512 = vmatprep.subr.mxu0 0.0
        %513 = vmatpush1.msra.mxu0 0.0
        %514 = vmatprep.subr.mxu0 0.0
        %515 = vmatpush1.msra.mxu0 0.0
        %516 = vmatprep.subr.mxu0 0.0
        %517 = vmatpush1.msra.mxu0 0.0
        %518 = vmatprep.subr.mxu0 0.0
        %519 = vmatpush1.msra.mxu0 0.0
        %520 = vmatprep.subr.mxu0 0.0
        %521 = vmatpush1.msra.mxu0 0.0
        %522 = vmatprep.subr.mxu0 0.0
        %523 = vmatpush1.msra.mxu0 0.0
        %524 = vmatprep.subr.mxu0 0.0
        %525 = vmatpush1.msra.mxu0 0.0
        %526 = vmatprep.subr.mxu0 0.0
        %527 = vmatpush1.msra.mxu0 0.0
        %528 = vmatprep.subr.mxu0 0.0
        %529 = vmatpush1.msra.mxu0 0.0
        %530 = vmatprep.subr.mxu0 0.0
        %531 = vmatpush1.msra.mxu0 0.0
        %532 = vmatprep.subr.mxu0 0.0
        %533 = vmatpush1.msra.mxu0 0.0
        %534 = vmatprep.subr.mxu0 0.0
        %535 = vmatpush1.msra.mxu0 0.0
        %536 = vmatprep.subr.mxu0 0.0
        %537 = vmatpush1.msra.mxu0 0.0
        %538 = vmatprep.subr.mxu0 0.0
        %539 = vmatpush1.msra.mxu0 0.0
        %540 = vmatprep.subr.mxu0 0.0
        %541 = vmatpush1.msra.mxu0 0.0
        %542 = vmatprep.subr.mxu0 0.0
        %543 = vmatpush1.msra.mxu0 0.0
        %544 = vmatprep.subr.mxu0 0.0
        %545 = vmatpush1.msra.mxu0 0.0
        %546 = vmatprep.subr.mxu0 0.0
        %547 = vmatpush1.msra.mxu0 0.0
        %548 = vmatprep.subr.mxu0 0.0
        %549 = vmatpush1.msra.mxu0 0.0
        %550 = vmatprep.subr.mxu0 0.0
        %551 = vmatpush1.msra.mxu0 0.0
        %552 = vmatprep.subr.mxu0 0.0
        %553 = vmatpush1.msra.mxu0 0.0
        %554 = vmatprep.subr.mxu0 0.0
        %555 = vmatpush1.msra.mxu0 0.0
        %556 = vmatprep.mubr.f32.mxu0 0.0
        %557 = vmatmul.mubr.f32.gmra.mrb[0].mxu0 %v465
        %v558 = vpop.f32.mrb[0].mxu0
        %v559 = vadd.f32 0.0, %v558
        %v560 = vpop.f32.mrb[0].mxu0
        %561 = vmatprep.mubr.f32.mxu0 0.0
        %562 = vmatmul.mubr.f32.gmra.mrb[0].mxu0 %v468
        %v563 = vpop.f32.mrb[0].mxu0
        %v564 = vadd.f32 0.0, %v563
        %v565 = vpop.f32.mrb[0].mxu0
        %566 = vmatprep.mubr.f32.mxu0 0.0
        %567 = vmatmul.mubr.f32.gmra.mrb[0].mxu0 %v471
        %v568 = vpop.f32.mrb[0].mxu0
        %v569 = vadd.f32 0.0, %v568
        %v570 = vpop.f32.mrb[0].mxu0
        %571 = vmatprep.mubr.f32.mxu0 0.0
        %572 = vmatmul.mubr.f32.gmra.mrb[0].mxu0 %v474
        %v573 = vpop.f32.mrb[0].mxu0
        %v574 = vadd.f32 0.0, %v573
        %v575 = vpop.f32.mrb[0].mxu0
        %576 = vmatprep.mubr.f32.mxu0 0.0
        %577 = vmatmul.mubr.f32.gmra.mrb[0].mxu0 %v477
        %v578 = vpop.f32.mrb[0].mxu0
        %v579 = vadd.f32 0.0, %v578
        %v580 = vpop.f32.mrb[0].mxu0
        %581 = vmatprep.mubr.f32.mxu0 0.0
        %582 = vmatmul.mubr.f32.gmra.mrb[0].mxu0 %v480
        %v583 = vpop.f32.mrb[0].mxu0
        %v584 = vadd.f32 0.0, %v583
        %v585 = vpop.f32.mrb[0].mxu0
        %586 = vmatprep.mubr.f32.mxu0 0.0
        %587 = vmatmul.mubr.f32.gmra.mrb[0].mxu0 %v483
        %v588 = vpop.f32.mrb[0].mxu0
        %v589 = vadd.f32 0.0, %v588
        %v590 = vpop.f32.mrb[0].mxu0
        %591 = vmatprep.mubr.f32.mxu0 0.0
        %592 = vmatmul.mubr.f32.gmra.mrb[0].mxu0 %v486
        %v593 = vpop.f32.mrb[0].mxu0
        %v594 = vadd.f32 0.0, %v593
        %v595 = vpop.f32.mrb[0].mxu0
        %596 = vdwg.mxu0
        %605 = vrot.lane.b32.xlu0 %v559, 126
        %v606 = vpop.permute.xlu0 %605
        %607 = vrot.lane.b32.xlu0 %v564, 126
        %v608 = vpop.permute.xlu0 %607
        %609 = vrot.lane.b32.xlu0 %v569, 126
        %v610 = vpop.permute.xlu0 %609
        %611 = vrot.lane.b32.xlu0 %v574, 126
        %v612 = vpop.permute.xlu0 %611
        %613 = vrot.lane.b32.xlu0 %v579, 126
        %v614 = vpop.permute.xlu0 %613
        %615 = vrot.lane.b32.xlu0 %v584, 126
        %v616 = vpop.permute.xlu0 %615
        %617 = vrot.lane.b32.xlu0 %v589, 126
        %v618 = vpop.permute.xlu0 %617
        %619 = vrot.lane.b32.xlu0 %v594, 126
        %v620 = vpop.permute.xlu0 %619
        %v629 = vadd.f32 %v559, %v606
        %v630 = vadd.f32 %v564, %v608
        %v631 = vadd.f32 %v569, %v610
        %v632 = vadd.f32 %v574, %v612
        %v633 = vadd.f32 %v579, %v614
        %v634 = vadd.f32 %v584, %v616
        %v635 = vadd.f32 %v589, %v618
        %v636 = vadd.f32 %v594, %v620
        %v637 = vxor.u32 %v629, 2147483648
        %v638 = vxor.u32 %v630, 2147483648
        %v639 = vxor.u32 %v631, 2147483648
        %v640 = vxor.u32 %v632, 2147483648
        %v641 = vxor.u32 %v633, 2147483648
        %v642 = vxor.u32 %v634, 2147483648
        %v643 = vxor.u32 %v635, 2147483648
        %v644 = vxor.u32 %v636, 2147483648
        %v645 = vmul.f32 %v637, 1.442695
        %v646 = vpow.pop %v645
        %v647 = vmul.f32 %v638, 1.442695
        %v648 = vpow.pop %v647
        %v649 = vmul.f32 %v639, 1.442695
        %v650 = vpow.pop %v649
        %v651 = vmul.f32 %v640, 1.442695
        %v652 = vpow.pop %v651
        %v653 = vmul.f32 %v641, 1.442695
        %v654 = vpow.pop %v653
        %v655 = vmul.f32 %v642, 1.442695
        %v656 = vpow.pop %v655
        %v657 = vmul.f32 %v643, 1.442695
        %v658 = vpow.pop %v657
        %v659 = vmul.f32 %v644, 1.442695
        %v660 = vpow.pop %v659
        %v661 = vadd.f32 %v646, 1.0
        %v662 = vadd.f32 %v648, 1.0
        %v663 = vadd.f32 %v650, 1.0
        %v664 = vadd.f32 %v652, 1.0
        %v665 = vadd.f32 %v654, 1.0
        %v666 = vadd.f32 %v656, 1.0
        %v667 = vadd.f32 %v658, 1.0
        %v668 = vadd.f32 %v660, 1.0
        %v669 = vrcp.pop %v661
        %v670 = vmul.f32 1.0, %v669
        %v671 = vrcp.pop %v662
        %v672 = vmul.f32 1.0, %v671
        %v673 = vrcp.pop %v663
        %v674 = vmul.f32 1.0, %v673
        %v675 = vrcp.pop %v664
        %v676 = vmul.f32 1.0, %v675
        %v677 = vrcp.pop %v665
        %v678 = vmul.f32 1.0, %v677
        %v679 = vrcp.pop %v666
        %v680 = vmul.f32 1.0, %v679
        %v681 = vrcp.pop %v667
        %v682 = vmul.f32 1.0, %v681
        %v683 = vrcp.pop %v668
        %v684 = vmul.f32 1.0, %v683
        %693 = vrot.lane.b32.xlu0 %v670, 127
        %v694 = vpop.permute.xlu0 %693
        %695 = vrot.lane.b32.xlu0 %v672, 127
        %v696 = vpop.permute.xlu0 %695
        %697 = vrot.lane.b32.xlu0 %v674, 127
        %v698 = vpop.permute.xlu0 %697
        %699 = vrot.lane.b32.xlu0 %v676, 127
        %v700 = vpop.permute.xlu0 %699
        %701 = vrot.lane.b32.xlu0 %v678, 127
        %v702 = vpop.permute.xlu0 %701
        %703 = vrot.lane.b32.xlu0 %v680, 127
        %v704 = vpop.permute.xlu0 %703
        %705 = vrot.lane.b32.xlu0 %v682, 127
        %v706 = vpop.permute.xlu0 %705
        %707 = vrot.lane.b32.xlu0 %v684, 127
        %v708 = vpop.permute.xlu0 %707
        %709 = vset.pattern.permute.xlu0 0
        %710 = vperm.xlu0 %709, %v670
        %v711 = vpop.permute.xlu0 %710
        %713 = vset.pattern.permute.xlu0 0
        %714 = vperm.xlu0 %713, %v672
        %v715 = vpop.permute.xlu0 %714
        %717 = vset.pattern.permute.xlu0 0
        %718 = vperm.xlu0 %717, %v674
        %v719 = vpop.permute.xlu0 %718
        %721 = vset.pattern.permute.xlu0 0
        %722 = vperm.xlu0 %721, %v676
        %v723 = vpop.permute.xlu0 %722
        %725 = vset.pattern.permute.xlu0 0
        %726 = vperm.xlu0 %725, %v678
        %v727 = vpop.permute.xlu0 %726
        %729 = vset.pattern.permute.xlu0 0
        %730 = vperm.xlu0 %729, %v680
        %v731 = vpop.permute.xlu0 %730
        %733 = vset.pattern.permute.xlu0 0
        %734 = vperm.xlu0 %733, %v682
        %v735 = vpop.permute.xlu0 %734
        %737 = vset.pattern.permute.xlu0 0
        %738 = vperm.xlu0 %737, %v684
        %v739 = vpop.permute.xlu0 %738
        %741 = vset.pattern.permute.xlu0 0
        %742 = vperm.xlu0 %741, %v694
        %v743 = vpop.permute.xlu0 %742
        %745 = vset.pattern.permute.xlu0 0
        %746 = vperm.xlu0 %745, %v696
        %v747 = vpop.permute.xlu0 %746
        %749 = vset.pattern.permute.xlu0 0
        %750 = vperm.xlu0 %749, %v698
        %v751 = vpop.permute.xlu0 %750
        %753 = vset.pattern.permute.xlu0 0
        %754 = vperm.xlu0 %753, %v700
        %v755 = vpop.permute.xlu0 %754
        %757 = vset.pattern.permute.xlu0 0
        %758 = vperm.xlu0 %757, %v702
        %v759 = vpop.permute.xlu0 %758
        %761 = vset.pattern.permute.xlu0 0
        %762 = vperm.xlu0 %761, %v704
        %v763 = vpop.permute.xlu0 %762
        %765 = vset.pattern.permute.xlu0 0
        %766 = vperm.xlu0 %765, %v706
        %v767 = vpop.permute.xlu0 %766
        %769 = vset.pattern.permute.xlu0 0
        %770 = vperm.xlu0 %769, %v708
        %v771 = vpop.permute.xlu0 %770
        %v773 = vmul.f32 %v192, %v711
        %v774 = vmul.f32 %v193, %v711
        %v775 = vmul.f32 %v194, %v715
        %v776 = vmul.f32 %v195, %v715
        %v777 = vmul.f32 %v196, %v719
        %v778 = vmul.f32 %v197, %v719
        %v779 = vmul.f32 %v198, %v723
        %v780 = vmul.f32 %v199, %v723
        %v781 = vmul.f32 %v200, %v727
        %v782 = vmul.f32 %v201, %v727
        %v783 = vmul.f32 %v202, %v731
        %v784 = vmul.f32 %v203, %v731
        %v785 = vmul.f32 %v204, %v735
        %v786 = vmul.f32 %v205, %v735
        %v787 = vmul.f32 %v206, %v739
        %v788 = vmul.f32 %v207, %v739
        %v789 = vmul.f32 %v208, %v743
        %v790 = vmul.f32 %v209, %v743
        %v791 = vmul.f32 %v210, %v747
        %v792 = vmul.f32 %v211, %v747
        %v793 = vmul.f32 %v212, %v751
        %v794 = vmul.f32 %v213, %v751
        %v795 = vmul.f32 %v214, %v755
        %v796 = vmul.f32 %v215, %v755
        %v797 = vmul.f32 %v216, %v759
        %v798 = vmul.f32 %v217, %v759
        %v799 = vmul.f32 %v218, %v763
        %v800 = vmul.f32 %v219, %v763
        %v801 = vmul.f32 %v220, %v767
        %v802 = vmul.f32 %v221, %v767
        %v803 = vmul.f32 %v222, %v771
        %v804 = vmul.f32 %v223, %v771
        %805 = vst [vmem:[%s189] sm:$0xff] %v773
        %806 = vst [vmem:[%s189 + $0x8] sm:$0xff] %v774
        %807 = vst [vmem:[%s189 + $0x10] sm:$0xff] %v775
        %808 = vst [vmem:[%s189 + $0x18] sm:$0xff] %v776
        %809 = vst [vmem:[%s189 + $0x20] sm:$0xff] %v777
        %810 = vst [vmem:[%s189 + $0x28] sm:$0xff] %v778
        %811 = vst [vmem:[%s189 + $0x30] sm:$0xff] %v779
        %812 = vst [vmem:[%s189 + $0x38] sm:$0xff] %v780
        %813 = vst [vmem:[%s189 + $0x40] sm:$0xff] %v781
        %814 = vst [vmem:[%s189 + $0x48] sm:$0xff] %v782
        %815 = vst [vmem:[%s189 + $0x50] sm:$0xff] %v783
        %816 = vst [vmem:[%s189 + $0x58] sm:$0xff] %v784
        %817 = vst [vmem:[%s189 + $0x60] sm:$0xff] %v785
        %818 = vst [vmem:[%s189 + $0x68] sm:$0xff] %v786
        %819 = vst [vmem:[%s189 + $0x70] sm:$0xff] %v787
        %820 = vst [vmem:[%s189 + $0x78] sm:$0xff] %v788
        %821 = vst [vmem:[%s189 + $0x80] sm:$0xff] %v789
        %822 = vst [vmem:[%s189 + $0x88] sm:$0xff] %v790
        %823 = vst [vmem:[%s189 + $0x90] sm:$0xff] %v791
        %824 = vst [vmem:[%s189 + $0x98] sm:$0xff] %v792
        %825 = vst [vmem:[%s189 + $0xa0] sm:$0xff] %v793
        %826 = vst [vmem:[%s189 + $0xa8] sm:$0xff] %v794
        %827 = vst [vmem:[%s189 + $0xb0] sm:$0xff] %v795
        %828 = vst [vmem:[%s189 + $0xb8] sm:$0xff] %v796
        %829 = vst [vmem:[%s189 + $0xc0] sm:$0xff] %v797
        %830 = vst [vmem:[%s189 + $0xc8] sm:$0xff] %v798
        %831 = vst [vmem:[%s189 + $0xd0] sm:$0xff] %v799
        %832 = vst [vmem:[%s189 + $0xd8] sm:$0xff] %v800
        %833 = vst [vmem:[%s189 + $0xe0] sm:$0xff] %v801
        %834 = vst [vmem:[%s189 + $0xe8] sm:$0xff] %v802
        %835 = vst [vmem:[%s189 + $0xf0] sm:$0xff] %v803
        %836 = vst [vmem:[%s189 + $0xf8] sm:$0xff] %v804
        %s837 = sand.u32 %s96, 1
        %s838 = scalar_lea.sflag [#allocation4], %s837
        %s839 = sand.u32 %s96, 1
        %s840 = smul.addr %s839, 256
        %s841 = scalar_lea.vmem [#allocation5], %s840
        // Predicated region
        $region37: #{tpu_custom_call.1} parent=31 // pred_check
          %p842 = pneg %p106
        $region38: #{tpu_custom_call.1} parent=31 // pred_check_branch
          %844 = sbr.rel (%p842) target = $region40
        $region39: #{tpu_custom_call.1} parent=31 // pred_region
          %s845 = smul.u32 2, %s20
          %s847 = ssub.s32 4096, 4096
          %848 = vsyncadd %s838, %s847
          %s849 = smul.addr %s845, 16
          %s850 = smul.addr %s849, 128
          %s851 = scalar_lea.hbm %s3, %s850
          %s852 = sshll.u32 %s841, 4
          %s853 = int_to_ptr.vmem [resolvable:$true] %s852
          %858 = dma.vmem_to_hbm [thread:$0]  %s853, 4096, %s851, %s838, 256, 256, 16
        $region40: #{tpu_custom_call.1} parent=31 // pred_fallthru
          _
      $region32: #{tpu_custom_call.1} parent=5 // pred_fallthru
        _
      %p859 = scmp.le.s32.totalorder 2, %s15
      // Predicated region
      $region41: #{tpu_custom_call.1} parent=5 // pred_check
        %p860 = pneg %p859
      $region42: #{tpu_custom_call.1} parent=5 // pred_check_branch
        %862 = sbr.rel (%p860) target = $region44
      $region43: #{tpu_custom_call.1} parent=5 // pred_region
        %s863 = ssub.s32 %s15, 2
        // Predicated region
        $region45: #{tpu_custom_call.1} parent=43 // pred_check
          %p864 = pneg %p112
        $region46: #{tpu_custom_call.1} parent=43 // pred_check_branch
          %866 = sbr.rel (%p864) target = $region48
        $region47: #{tpu_custom_call.1} parent=43 // pred_region
          %s867 = sand.u32 %s97, 1
          %s868 = scalar_lea.sflag [#allocation4], %s867
          %s869 = sand.u32 %s97, 1
          %s870 = smul.addr %s869, 256
          %s871 = scalar_lea.vmem [#allocation5], %s870
          %872 = dma.done %s868, 4096
        $region48: #{tpu_custom_call.1} parent=43 // pred_fallthru
          _
      $region44: #{tpu_custom_call.1} parent=5 // pred_fallthru
        _
    $region6: #{tpu_custom_call.1} parent=1 // loop_footer
      %s19 = sadd.s32 1, %s15
    $region7: #{tpu_custom_call.1} parent=1 // loop_footer_branch
      %14 = sbr.rel target = $region3
    $region8: #{tpu_custom_call.1} parent=1 // loop_exit
      _
    %873 = vsyncpa [#allocation3], 1
    %s874 = scalar_lea.sflag [#allocation3], 1
    %875 = vsyncpa %s874, 1
    %876 = vsyncpa [#allocation4], 1
    %s877 = scalar_lea.sflag [#allocation4], 1
    %878 = vsyncpa %s877, 1

</llo_original>
